<compile_context>
chip_gen: v6e
topology: v6e:2x2x1
jax: 0.10.0
libtpu: 0.0.40
codegen_flags: <defaults>
</compile_context>

<pallas_src>
import math

import jax
import jax.numpy as jnp
from jax.experimental import pallas as pl
from jax.experimental.pallas import tpu as pltpu

STATE_DIM = 32     # env.observation_space.shape[0]
ACTION_DIM = 8     # env.action_space.shape[0]
HIDDEN = 256
BATCH = 2
MAX_TILE_M = 256   # rows per grid step (fills the 256-row MXU on v6e/v7x)

# Row offsets of each parameter inside the packed [TOTAL_ROWS_PAD, HIDDEN] slab.
# (All offsets are multiples of 16 -> bf16 sublane-tile aligned slices.)
R1 = STATE_DIM            # end of W1   [32, 256]
R2 = R1 + HIDDEN          # end of W2   [256,256]
R3 = R2 + HIDDEN          # end of W3
R4 = R3 + HIDDEN          # end of W4
R5 = R4 + HIDDEN          # end of W5
R6 = R5 + HIDDEN          # end of W6 (zero-padded to 256 output lanes)
TOTAL_ROWS = R6 + 1       # +1 row for b6 (zero-padded to 256 lanes)
TOTAL_ROWS_PAD = ((TOTAL_ROWS + 15) // 16) * 16   # 1328: tile-complete bf16 layout


def _mm(h, w_bf16):
    """bf16 MXU matmul with f32 accumulation."""
    return jnp.dot(h.astype(jnp.bfloat16), w_bf16,
                   preferred_element_type=jnp.float32)


def _softsign(h):
    # x / (1 + |x|) with the reciprocal on the EUP slot (VALU stays free).
    return h * pl.reciprocal(1.0 + jnp.abs(h), approx=True)


def actor_kernel(x_ref, p_ref, o_ref):
    x = x_ref[...]                                   # [TILE_M, STATE_DIM] f32
    # Layers 1-3: Linear + Softsign  (zero biases dropped)
    h = _softsign(_mm(x, p_ref[0:R1, :]))
    h = _softsign(_mm(h, p_ref[R1:R2, :]))
    h = _softsign(_mm(h, p_ref[R2:R3, :]))
    # Layers 4-5: Linear + ReLU      (zero biases dropped)
    h = jnp.maximum(_mm(h, p_ref[R3:R4, :]), 0.0)
    h = jnp.maximum(_mm(h, p_ref[R4:R5, :]), 0.0)
    # Output layer (W6 zero-padded to 256 lanes) + b6 + tanh
    h = _mm(h, p_ref[R5:R6, :]) + p_ref[R6:R6 + 1, :].astype(jnp.float32)
    o_ref[...] = jnp.tanh(h)                         # [TILE_M, HIDDEN] f32, lane-dense


def pack_params(params):
    """Pack (W[in,out], b[out]) f32 pairs into one bf16 [TOTAL_ROWS_PAD, HIDDEN] slab."""
    rows = []
    for i, (w, b) in enumerate(params):
        if i == 5:
            w = jnp.pad(w, ((0, 0), (0, HIDDEN - w.shape[1])))      # [256, 256]
            b = jnp.pad(b, (0, HIDDEN - b.shape[0])).reshape(1, -1)  # [1,  256]
            rows.append(w)
            rows.append(b)
        else:
            rows.append(w)   # biases b1..b5 are identically zero -> dropped
    slab = jnp.concatenate(rows, axis=0)
    assert slab.shape == (TOTAL_ROWS, HIDDEN)
    slab = jnp.pad(slab, ((0, TOTAL_ROWS_PAD - TOTAL_ROWS), (0, 0)))
    return slab.astype(jnp.bfloat16)


def softsign_actor(x, param_slab):
    """x: [B, STATE_DIM] float32 -> [B, ACTION_DIM] float32."""
    B = x.shape[0]
    Bp = ((B + 7) // 8) * 8                          # sublane tile; no-op if B % 8 == 0
    if Bp != B:
        x = jnp.pad(x, ((0, Bp - B), (0, 0)))

    tile_m = min(MAX_TILE_M, Bp)
    grid = (pl.cdiv(Bp, tile_m),)

    out = pl.pallas_call(
        actor_kernel,
        out_shape=jax.ShapeDtypeStruct((Bp, HIDDEN), jnp.float32),
        grid=grid,
        in_specs=[
            # x: blocked on rows, full (32-wide) trailing dim.
            pl.BlockSpec((tile_m, STATE_DIM), lambda i: (i, 0)),
            # weight slab: constant block index -> staged once, resident
            # in VMEM across all grid steps.
            pl.BlockSpec((TOTAL_ROWS_PAD, HIDDEN), lambda i: (0, 0)),
        ],
        out_specs=pl.BlockSpec((tile_m, HIDDEN), lambda i: (i, 0)),
        compiler_params=pltpu.CompilerParams(
            dimension_semantics=("parallel",),
            vmem_limit_bytes=32 * 1024 * 1024),
    )(x, param_slab)
    return out[:B, :ACTION_DIM]


softsign_actor_jit = jax.jit(softsign_actor)


# ---------------- deterministic parameter initialization ----------------
def _orthogonal(key, out_dim, in_dim, gain):
    # Mirrors torch.nn.init.orthogonal_ on a [out, in] weight, then transpose
    # to the kernel's [in, out] layout.
    w = jax.nn.initializers.orthogonal(scale=gain)(key, (out_dim, in_dim), jnp.float32)
    return w.T  # [in, out]


def _default_linear(key, out_dim, in_dim):
    # torch default: U(-1/sqrt(in), 1/sqrt(in)) for weight and bias.
    kw, kb = jax.random.split(key)
    bound = 1.0 / math.sqrt(in_dim)
    w = jax.random.uniform(kw, (out_dim, in_dim), jnp.float32, -bound, bound)
    b = jax.random.uniform(kb, (out_dim,), jnp.float32, -bound, bound)
    return w.T, b


def make_params(key):
    gain_sigmoid = 1.0            # nn.init.calculate_gain('sigmoid')
    gain_relu = math.sqrt(2.0)    # nn.init.calculate_gain('relu')
    keys = jax.random.split(key, 6)
    params = []
    # init_s_ layers (bias = 0)
    params.append((_orthogonal(keys[0], HIDDEN, STATE_DIM, gain_sigmoid),
                   jnp.zeros((HIDDEN,), jnp.float32)))
    params.append((_orthogonal(keys[1], HIDDEN, HIDDEN, gain_sigmoid),
                   jnp.zeros((HIDDEN,), jnp.float32)))
    params.append((_orthogonal(keys[2], HIDDEN, HIDDEN, gain_sigmoid),
                   jnp.zeros((HIDDEN,), jnp.float32)))
    # init_r_ layers (bias = 0)
    params.append((_orthogonal(keys[3], HIDDEN, HIDDEN, gain_relu),
                   jnp.zeros((HIDDEN,), jnp.float32)))
    params.append((_orthogonal(keys[4], HIDDEN, HIDDEN, gain_relu),
                   jnp.zeros((HIDDEN,), jnp.float32)))
    # final layer: torch default init
    params.append(_default_linear(keys[5], ACTION_DIM, HIDDEN))
    return params


def reference_forward(x, params):
    """bf16-consistent JAX reference (same weight quantization as the kernel)."""
    h = x
    for i, (w, b) in enumerate(params):
        wq = w.astype(jnp.bfloat16)
        h = jnp.dot(h.astype(jnp.bfloat16), wq, preferred_element_type=jnp.float32)
        if i == 5:
            h = h + b.astype(jnp.bfloat16).astype(jnp.float32)
        if i < 3:
            h = h / (1.0 + jnp.abs(h))
        elif i < 5:
            h = jnp.maximum(h, 0.0)
    return jnp.tanh(h)


if __name__ == "__main__":
    key = jax.random.PRNGKey(0)
    kp, kx = jax.random.split(key)
    params = make_params(kp)
    slab = pack_params(params)

    # Small-batch rollout case (B=2, padded to one 8-row tile, grid=(1,)).
    x_small = jax.random.normal(kx, (BATCH, STATE_DIM), jnp.float32)
    out_small = softsign_actor_jit(x_small, slab)
    jax.block_until_ready(out_small)
    ref_small = reference_forward(x_small, params)
    assert out_small.shape == (BATCH, ACTION_DIM)
    # Tolerance covers the EUP approximate reciprocal in softsign and MXU
    # accumulation-order differences (weights are identically bf16-quantized).
    assert jnp.allclose(out_small, ref_small, atol=2e-2, rtol=2e-2), \
        "mismatch vs JAX reference (B=2)"

    # Larger batch exercises the row grid (2 steps of 256 rows) with the
    # weight slab staged once and resident across steps.
    x_big = jax.random.normal(jax.random.fold_in(kx, 1), (512, STATE_DIM), jnp.float32)
    out_big = softsign_actor_jit(x_big, slab)
    jax.block_until_ready(out_big)
    ref_big = reference_forward(x_big, params)
    assert out_big.shape == (512, ACTION_DIM)
    assert jnp.allclose(out_big, ref_big, atol=2e-2, rtol=2e-2), \
        "mismatch vs JAX reference (B=512)"

    print("KERNEL_OK")
</pallas_src>

<mosaic_0001>
module attributes {stable_mosaic.version = 11 : i64} {
  func.func @actor_kernel(%arg0: i32, %arg1: memref<8x32xf32, #tpu.memory_space<vmem>>, %arg2: memref<1328x256xbf16, #tpu.memory_space<vmem>>, %arg3: memref<8x256xf32, #tpu.memory_space<vmem>>) attributes {dimension_semantics = [#tpu.dimension_semantics<parallel>], iteration_bounds = array<i64: 1>, scalar_prefetch = 0 : i64, scratch_operands = 0 : i64, tpu.core_type = #tpu.core_type<tc>, window_params = [{transform_indices = @transform_0, window_bounds = array<i64: 8, 32>}, {pipeline_mode = #tpu.pipeline_mode<synchronous>, transform_indices = @transform_1, window_bounds = array<i64: 1328, 256>}, {transform_indices = @transform_2, window_bounds = array<i64: 8, 256>}]} {
    %c0 = arith.constant 0 : index
    %c0_0 = arith.constant 0 : index
    %0 = vector.load %arg1[%c0, %c0_0] : memref<8x32xf32, #tpu.memory_space<vmem>>, vector<8x32xf32>
    %c0_1 = arith.constant 0 : index
    %c0_2 = arith.constant 0 : index
    %1 = vector.load %arg2[%c0_1, %c0_2] : memref<1328x256xbf16, #tpu.memory_space<vmem>>, vector<32x256xbf16>
    %2 = arith.truncf %0 : vector<8x32xf32> to vector<8x32xbf16>
    %cst = arith.constant dense<0.000000e+00> : vector<8x256xf32>
    %3 = tpu.matmul %2, %1, %cst {dimension_numbers = #tpu.dot_dimension_numbers<[1], [0], [0], [1], [0, 0, 1, 1], [], []>} : vector<8x32xbf16>, vector<32x256xbf16>, vector<8x256xf32> -> vector<8x256xf32>
    %4 = math.absf %3 : vector<8x256xf32>
    %cst_3 = arith.constant 1.000000e+00 : f32
    %5 = vector.broadcast %cst_3 : f32 to vector<8x256xf32>
    %6 = arith.addf %5, %4 : vector<8x256xf32>
    %7 = tpu.reciprocal %6 {approx = true} : vector<8x256xf32> -> vector<8x256xf32>
    %8 = arith.mulf %3, %7 : vector<8x256xf32>
    %c32 = arith.constant 32 : index
    %c0_4 = arith.constant 0 : index
    %9 = vector.load %arg2[%c32, %c0_4] : memref<1328x256xbf16, #tpu.memory_space<vmem>>, vector<256x256xbf16>
    %10 = arith.truncf %8 : vector<8x256xf32> to vector<8x256xbf16>
    %cst_5 = arith.constant dense<0.000000e+00> : vector<8x256xf32>
    %11 = tpu.matmul %10, %9, %cst_5 {dimension_numbers = #tpu.dot_dimension_numbers<[1], [0], [0], [1], [0, 0, 1, 1], [], []>} : vector<8x256xbf16>, vector<256x256xbf16>, vector<8x256xf32> -> vector<8x256xf32>
    %12 = math.absf %11 : vector<8x256xf32>
    %cst_6 = arith.constant 1.000000e+00 : f32
    %13 = vector.broadcast %cst_6 : f32 to vector<8x256xf32>
    %14 = arith.addf %13, %12 : vector<8x256xf32>
    %15 = tpu.reciprocal %14 {approx = true} : vector<8x256xf32> -> vector<8x256xf32>
    %16 = arith.mulf %11, %15 : vector<8x256xf32>
    %c288 = arith.constant 288 : index
    %c0_7 = arith.constant 0 : index
    %17 = vector.load %arg2[%c288, %c0_7] : memref<1328x256xbf16, #tpu.memory_space<vmem>>, vector<256x256xbf16>
    %18 = arith.truncf %16 : vector<8x256xf32> to vector<8x256xbf16>
    %cst_8 = arith.constant dense<0.000000e+00> : vector<8x256xf32>
    %19 = tpu.matmul %18, %17, %cst_8 {dimension_numbers = #tpu.dot_dimension_numbers<[1], [0], [0], [1], [0, 0, 1, 1], [], []>} : vector<8x256xbf16>, vector<256x256xbf16>, vector<8x256xf32> -> vector<8x256xf32>
    %20 = math.absf %19 : vector<8x256xf32>
    %cst_9 = arith.constant 1.000000e+00 : f32
    %21 = vector.broadcast %cst_9 : f32 to vector<8x256xf32>
    %22 = arith.addf %21, %20 : vector<8x256xf32>
    %23 = tpu.reciprocal %22 {approx = true} : vector<8x256xf32> -> vector<8x256xf32>
    %24 = arith.mulf %19, %23 : vector<8x256xf32>
    %c544 = arith.constant 544 : index
    %c0_10 = arith.constant 0 : index
    %25 = vector.load %arg2[%c544, %c0_10] : memref<1328x256xbf16, #tpu.memory_space<vmem>>, vector<256x256xbf16>
    %26 = arith.truncf %24 : vector<8x256xf32> to vector<8x256xbf16>
    %cst_11 = arith.constant dense<0.000000e+00> : vector<8x256xf32>
    %27 = tpu.matmul %26, %25, %cst_11 {dimension_numbers = #tpu.dot_dimension_numbers<[1], [0], [0], [1], [0, 0, 1, 1], [], []>} : vector<8x256xbf16>, vector<256x256xbf16>, vector<8x256xf32> -> vector<8x256xf32>
    %cst_12 = arith.constant 0.000000e+00 : f32
    %28 = vector.broadcast %cst_12 : f32 to vector<8x256xf32>
    %29 = arith.maximumf %27, %28 : vector<8x256xf32>
    %c800 = arith.constant 800 : index
    %c0_13 = arith.constant 0 : index
    %30 = vector.load %arg2[%c800, %c0_13] : memref<1328x256xbf16, #tpu.memory_space<vmem>>, vector<256x256xbf16>
    %31 = arith.truncf %29 : vector<8x256xf32> to vector<8x256xbf16>
    %cst_14 = arith.constant dense<0.000000e+00> : vector<8x256xf32>
    %32 = tpu.matmul %31, %30, %cst_14 {dimension_numbers = #tpu.dot_dimension_numbers<[1], [0], [0], [1], [0, 0, 1, 1], [], []>} : vector<8x256xbf16>, vector<256x256xbf16>, vector<8x256xf32> -> vector<8x256xf32>
    %cst_15 = arith.constant 0.000000e+00 : f32
    %33 = vector.broadcast %cst_15 : f32 to vector<8x256xf32>
    %34 = arith.maximumf %32, %33 : vector<8x256xf32>
    %c1056 = arith.constant 1056 : index
    %c0_16 = arith.constant 0 : index
    %35 = vector.load %arg2[%c1056, %c0_16] : memref<1328x256xbf16, #tpu.memory_space<vmem>>, vector<256x256xbf16>
    %36 = arith.truncf %34 : vector<8x256xf32> to vector<8x256xbf16>
    %cst_17 = arith.constant dense<0.000000e+00> : vector<8x256xf32>
    %37 = tpu.matmul %36, %35, %cst_17 {dimension_numbers = #tpu.dot_dimension_numbers<[1], [0], [0], [1], [0, 0, 1, 1], [], []>} : vector<8x256xbf16>, vector<256x256xbf16>, vector<8x256xf32> -> vector<8x256xf32>
    %c1312 = arith.constant 1312 : index
    %c0_18 = arith.constant 0 : index
    %38 = vector.load %arg2[%c1312, %c0_18] : memref<1328x256xbf16, #tpu.memory_space<vmem>>, vector<1x256xbf16>
    %39 = arith.extf %38 : vector<1x256xbf16> to vector<1x256xf32>
    %40 = vector.broadcast %39 : vector<1x256xf32> to vector<8x256xf32>
    %41 = arith.addf %37, %40 : vector<8x256xf32>
    %42 = math.tanh %41 : vector<8x256xf32>
    %c0_19 = arith.constant 0 : index
    %c0_20 = arith.constant 0 : index
    %43 = vector.load %arg3[%c0_19, %c0_20] : memref<8x256xf32, #tpu.memory_space<vmem>>, vector<8x256xf32>
    tpu.vector_store %arg3[%c0_19, %c0_20], %42 {strides = array<i32>} : memref<8x256xf32, #tpu.memory_space<vmem>>, vector<8x256xf32>,
    return
  }
  func.func @transform_0(%arg0: i32) -> (i32, i32) {
    %c0_i32 = arith.constant 0 : i32
    %c0_i32_0 = arith.constant 0 : i32
    return %arg0, %c0_i32 : i32, i32
  }
  func.func @transform_1(%arg0: i32) -> (i32, i32) {
    %c0_i32 = arith.constant 0 : i32
    %c0_i32_0 = arith.constant 0 : i32
    %c0_i32_1 = arith.constant 0 : i32
    return %c0_i32, %c0_i32_0 : i32, i32
  }
  func.func @transform_2(%arg0: i32) -> (i32, i32) {
    %c0_i32 = arith.constant 0 : i32
    %c0_i32_0 = arith.constant 0 : i32
    return %arg0, %c0_i32 : i32, i32
  }
}

</mosaic_0001>

<llo_original>
// kernel: softsign_actor.1
$region0: #{softsign_actor.1}
  #allocation0 [shape = 'u32[]', space=smem, size = 0x4, offset = 0x4, fixed_abs, tag = 'smem constant byte address 0x4 - core index']
  #allocation1 [shape = 'u32[144,128]{1,0:T(1,128)}', space=vmem, size = 0x12000, scoped, tag = 'internal scratch']
  %s0 = inlined_call_operand.vmem [shape: f32[8,32], index: 0, kind: input, shape index: {}]
  %s1 = inlined_call_operand.hbm [shape: bf16[1328,256], index: 1, kind: input, shape index: {}]
  %s2 = inlined_call_operand.vmem [shape: f32[8,256], index: 2, kind: output, shape index: {}]
  %s3 = sld [smem:[#allocation0]]
  $region22: #{softsign_actor.1} parent=0
    _
  %s5 = ssub.s32 1, %s3
  %s6 = scalar_select 0, %s5, %s3
  $region1: #{softsign_actor.1} parent=0
    #allocation2 [shape = 'u8[679936]{0}', space=vmem, size = 0xa6000, scoped, tag = 'input window, operand 1, single buffered']
    #allocation3 [shape = 's32[1]{0}', space=sflag, size = 0x4, scoped, tag = 'scoped memory for softsign_actor.1']
    %7 = vsyncpa [#allocation3], 0
    // Predicated region
    $region2: #{softsign_actor.1} parent=1 // pred_check
      _
    $region3: #{softsign_actor.1} parent=1 // pred_check_branch
      %9 = sbr.rel (0) target = $region5
    $region4: #{softsign_actor.1} parent=1 // pred_region
      _
    $region5: #{softsign_actor.1} parent=1 // pred_fallthru
      _
    // Predicated region
    $region6: #{softsign_actor.1} parent=1 // pred_check
      _
    $region7: #{softsign_actor.1} parent=1 // pred_check_branch
      %11 = sbr.rel (0) target = $region9
    $region8: #{softsign_actor.1} parent=1 // pred_region
      %s13 = ssub.s32 21248, 21248
      %14 = vsyncadd [#allocation3], %s13
      %s15 = sshll.u32 [#allocation2], 4
      %s16 = int_to_ptr.vmem [resolvable:$true] %s15
      %21 = dma.hbm_to_vmem [thread:$0]  %s1, 21248, %s16, [#allocation3], 128, 128, 8
    $region9: #{softsign_actor.1} parent=1 // pred_fallthru
      _
    // Predicated region
    $region10: #{softsign_actor.1} parent=1 // pred_check
      _
    $region11: #{softsign_actor.1} parent=1 // pred_check_branch
      %23 = sbr.rel (0) target = $region13
    $region12: #{softsign_actor.1} parent=1 // pred_region
      %24 = dma.done [#allocation3], 21248
    $region13: #{softsign_actor.1} parent=1 // pred_fallthru
      _
    %v26 = vld [vmem:[%s0] sm:$0xff]
    %v27 = vld [vmem:[#allocation2] sm:$0xff]
    %v28 = vld [vmem:[#allocation2 + $0x8] sm:$0xff]
    %v29 = vld [vmem:[#allocation2 + $0x10] sm:$0xff]
    %v30 = vld [vmem:[#allocation2 + $0x18] sm:$0xff]
    %v31 = vpack.c.bf16 %v26, %v26
    %v36 = vunpack.c.l.b16 %v27
    %v37 = vunpack.c.h.b16 %v27
    %v38 = vunpack.c.l.b16 %v28
    %v39 = vunpack.c.h.b16 %v28
    %v40 = vunpack.c.l.b16 %v29
    %v41 = vunpack.c.h.b16 %v29
    %v42 = vunpack.c.l.b16 %v30
    %v43 = vunpack.c.h.b16 %v30
    %v44 = vpack.c.b16 %v38, %v36
    %v45 = vpack.c.b16 %v39, %v37
    %v46 = vpack.c.b16 %v42, %v40
    %v47 = vpack.c.b16 %v43, %v41
    %vm52 = vcmask 261120
    %v54 = vsel %vm52, %v31, 0
    %56 = vmatprep.subr.bf16.mxu0 0
    %57 = vmatpush1.bf16.msra.mxu0 0
    %58 = vmatprep.subr.bf16.mxu0 0
    %59 = vmatpush1.bf16.msra.mxu0 0
    %60 = vmatprep.subr.bf16.mxu0 0
    %61 = vmatpush1.bf16.msra.mxu0 0
    %62 = vmatprep.subr.bf16.mxu0 0
    %63 = vmatpush1.bf16.msra.mxu0 0
    %64 = vmatprep.subr.bf16.mxu0 0
    %65 = vmatpush1.bf16.msra.mxu0 0
    %66 = vmatprep.subr.bf16.mxu0 0
    %67 = vmatpush1.bf16.msra.mxu0 0
    %68 = vmatprep.subr.bf16.mxu0 %v47
    %69 = vmatpush1.bf16.msra.mxu0 %v46
    %70 = vmatprep.subr.bf16.mxu0 %v45
    %71 = vmatpush1.bf16.msra.mxu0 %v44
    %72 = vmatprep.subr.bf16.mxu0 0
    %73 = vmatpush2.bf16.msra.mxu0 0
    %74 = vmatprep.subr.bf16.mxu0 0
    %75 = vmatpush2.bf16.msra.mxu0 0
    %76 = vmatprep.subr.bf16.mxu0 0
    %77 = vmatpush2.bf16.msra.mxu0 0
    %78 = vmatprep.subr.bf16.mxu0 0
    %79 = vmatpush2.bf16.msra.mxu0 0
    %80 = vmatprep.subr.bf16.mxu0 0
    %81 = vmatpush2.bf16.msra.mxu0 0
    %82 = vmatprep.subr.bf16.mxu0 0
    %83 = vmatpush2.bf16.msra.mxu0 0
    %84 = vmatprep.subr.bf16.mxu0 0
    %85 = vmatpush2.bf16.msra.mxu0 0
    %86 = vmatprep.subr.bf16.mxu0 0
    %87 = vmatpush2.bf16.msra.mxu0 0
    %88 = vmatprep.mubr.bf16.mxu0 0
    %89 = vmatmul.mubr.bf16.gmra.mxu0 %v54
    %v90 = vpop.f32.mrf.mxu0
    %v91 = vadd.f32 0.0, %v90
    %v92 = vpop.f32.mrf.mxu0
    %v93 = vadd.f32 0.0, %v92
    %v94 = vpop.f32.mrf.mxu0
    %v95 = vpop.f32.mrf.mxu0
    %96 = vdwg.mxu0
    %v97 = vand.u32 2147483647, %v91
    %v98 = vand.u32 2147483647, %v93
    %v99 = vadd.f32 %v97, 1.0
    %v100 = vadd.f32 %v98, 1.0
    %v101 = vrcp.pop %v99
    %v102 = vrcp.pop %v100
    %v103 = vmul.f32 %v91, %v101
    %v104 = vmul.f32 %v93, %v102
    %v105 = vld [vmem:[#allocation2 + $0x20] sm:$0xff]
    %v106 = vld [vmem:[#allocation2 + $0x28] sm:$0xff]
    %v107 = vld [vmem:[#allocation2 + $0x30] sm:$0xff]
    %v108 = vld [vmem:[#allocation2 + $0x38] sm:$0xff]
    %v109 = vld [vmem:[#allocation2 + $0x40] sm:$0xff]
    %v110 = vld [vmem:[#allocation2 + $0x48] sm:$0xff]
    %v111 = vld [vmem:[#allocation2 + $0x50] sm:$0xff]
    %v112 = vld [vmem:[#allocation2 + $0x58] sm:$0xff]
    %v113 = vld [vmem:[#allocation2 + $0x60] sm:$0xff]
    %v114 = vld [vmem:[#allocation2 + $0x68] sm:$0xff]
    %v115 = vld [vmem:[#allocation2 + $0x70] sm:$0xff]
    %v116 = vld [vmem:[#allocation2 + $0x78] sm:$0xff]
    %v117 = vld [vmem:[#allocation2 + $0x80] sm:$0xff]
    %v118 = vld [vmem:[#allocation2 + $0x88] sm:$0xff]
    %v119 = vld [vmem:[#allocation2 + $0x90] sm:$0xff]
    %v120 = vld [vmem:[#allocation2 + $0x98] sm:$0xff]
    %v121 = vld [vmem:[#allocation2 + $0xa0] sm:$0xff]
    %v122 = vld [vmem:[#allocation2 + $0xa8] sm:$0xff]
    %v123 = vld [vmem:[#allocation2 + $0xb0] sm:$0xff]
    %v124 = vld [vmem:[#allocation2 + $0xb8] sm:$0xff]
    %v125 = vld [vmem:[#allocation2 + $0xc0] sm:$0xff]
    %v126 = vld [vmem:[#allocation2 + $0xc8] sm:$0xff]
    %v127 = vld [vmem:[#allocation2 + $0xd0] sm:$0xff]
    %v128 = vld [vmem:[#allocation2 + $0xd8] sm:$0xff]
    %v129 = vld [vmem:[#allocation2 + $0xe0] sm:$0xff]
    %v130 = vld [vmem:[#allocation2 + $0xe8] sm:$0xff]
    %v131 = vld [vmem:[#allocation2 + $0xf0] sm:$0xff]
    %v132 = vld [vmem:[#allocation2 + $0xf8] sm:$0xff]
    %v133 = vld [vmem:[#allocation2 + $0x100] sm:$0xff]
    %v134 = vld [vmem:[#allocation2 + $0x108] sm:$0xff]
    %v135 = vld [vmem:[#allocation2 + $0x110] sm:$0xff]
    %v136 = vld [vmem:[#allocation2 + $0x118] sm:$0xff]
    %v137 = vpack.c.bf16 %v103, %v103
    %v138 = vpack.c.bf16 %v104, %v104
    %v171 = vunpack.c.l.b16 %v105
    %v172 = vunpack.c.h.b16 %v105
    %v173 = vunpack.c.l.b16 %v106
    %v174 = vunpack.c.h.b16 %v106
    %v175 = vunpack.c.l.b16 %v107
    %v176 = vunpack.c.h.b16 %v107
    %v177 = vunpack.c.l.b16 %v108
    %v178 = vunpack.c.h.b16 %v108
    %v179 = vunpack.c.l.b16 %v109
    %v180 = vunpack.c.h.b16 %v109
    %v181 = vunpack.c.l.b16 %v110
    %v182 = vunpack.c.h.b16 %v110
    %v183 = vunpack.c.l.b16 %v111
    %v184 = vunpack.c.h.b16 %v111
    %v185 = vunpack.c.l.b16 %v112
    %v186 = vunpack.c.h.b16 %v112
    %v187 = vunpack.c.l.b16 %v113
    %v188 = vunpack.c.h.b16 %v113
    %v189 = vunpack.c.l.b16 %v114
    %v190 = vunpack.c.h.b16 %v114
    %v191 = vunpack.c.l.b16 %v115
    %v192 = vunpack.c.h.b16 %v115
    %v193 = vunpack.c.l.b16 %v116
    %v194 = vunpack.c.h.b16 %v116
    %v195 = vunpack.c.l.b16 %v117
    %v196 = vunpack.c.h.b16 %v117
    %v197 = vunpack.c.l.b16 %v118
    %v198 = vunpack.c.h.b16 %v118
    %v199 = vunpack.c.l.b16 %v119
    %v200 = vunpack.c.h.b16 %v119
    %v201 = vunpack.c.l.b16 %v120
    %v202 = vunpack.c.h.b16 %v120
    %v203 = vunpack.c.l.b16 %v121
    %v204 = vunpack.c.h.b16 %v121
    %v205 = vunpack.c.l.b16 %v122
    %v206 = vunpack.c.h.b16 %v122
    %v207 = vunpack.c.l.b16 %v123
    %v208 = vunpack.c.h.b16 %v123
    %v209 = vunpack.c.l.b16 %v124
    %v210 = vunpack.c.h.b16 %v124
    %v211 = vunpack.c.l.b16 %v125
    %v212 = vunpack.c.h.b16 %v125
    %v213 = vunpack.c.l.b16 %v126
    %v214 = vunpack.c.h.b16 %v126
    %v215 = vunpack.c.l.b16 %v127
    %v216 = vunpack.c.h.b16 %v127
    %v217 = vunpack.c.l.b16 %v128
    %v218 = vunpack.c.h.b16 %v128
    %v219 = vunpack.c.l.b16 %v129
    %v220 = vunpack.c.h.b16 %v129
    %v221 = vunpack.c.l.b16 %v130
    %v222 = vunpack.c.h.b16 %v130
    %v223 = vunpack.c.l.b16 %v131
    %v224 = vunpack.c.h.b16 %v131
    %v225 = vunpack.c.l.b16 %v132
    %v226 = vunpack.c.h.b16 %v132
    %v227 = vunpack.c.l.b16 %v133
    %v228 = vunpack.c.h.b16 %v133
    %v229 = vunpack.c.l.b16 %v134
    %v230 = vunpack.c.h.b16 %v134
    %v231 = vunpack.c.l.b16 %v135
    %v232 = vunpack.c.h.b16 %v135
    %v233 = vunpack.c.l.b16 %v136
    %v234 = vunpack.c.h.b16 %v136
    %v235 = vpack.c.b16 %v173, %v171
    %v236 = vpack.c.b16 %v174, %v172
    %v237 = vpack.c.b16 %v177, %v175
    %v238 = vpack.c.b16 %v178, %v176
    %v239 = vpack.c.b16 %v181, %v179
    %v240 = vpack.c.b16 %v182, %v180
    %v241 = vpack.c.b16 %v185, %v183
    %v242 = vpack.c.b16 %v186, %v184
    %v243 = vpack.c.b16 %v189, %v187
    %v244 = vpack.c.b16 %v190, %v188
    %v245 = vpack.c.b16 %v193, %v191
    %v246 = vpack.c.b16 %v194, %v192
    %v247 = vpack.c.b16 %v197, %v195
    %v248 = vpack.c.b16 %v198, %v196
    %v249 = vpack.c.b16 %v201, %v199
    %v250 = vpack.c.b16 %v202, %v200
    %v251 = vpack.c.b16 %v205, %v203
    %v252 = vpack.c.b16 %v206, %v204
    %v253 = vpack.c.b16 %v209, %v207
    %v254 = vpack.c.b16 %v210, %v208
    %v255 = vpack.c.b16 %v213, %v211
    %v256 = vpack.c.b16 %v214, %v212
    %v257 = vpack.c.b16 %v217, %v215
    %v258 = vpack.c.b16 %v218, %v216
    %v259 = vpack.c.b16 %v221, %v219
    %v260 = vpack.c.b16 %v222, %v220
    %v261 = vpack.c.b16 %v225, %v223
    %v262 = vpack.c.b16 %v226, %v224
    %v263 = vpack.c.b16 %v229, %v227
    %v264 = vpack.c.b16 %v230, %v228
    %v265 = vpack.c.b16 %v233, %v231
    %v266 = vpack.c.b16 %v234, %v232
    %299 = vmatprep.subr.bf16.mxu0 %v250
    %300 = vmatpush1.bf16.msra.mxu0 %v249
    %301 = vmatprep.subr.bf16.mxu0 %v248
    %302 = vmatpush1.bf16.msra.mxu0 %v247
    %303 = vmatprep.subr.bf16.mxu0 %v246
    %304 = vmatpush1.bf16.msra.mxu0 %v245
    %305 = vmatprep.subr.bf16.mxu0 %v244
    %306 = vmatpush1.bf16.msra.mxu0 %v243
    %307 = vmatprep.subr.bf16.mxu0 %v242
    %308 = vmatpush1.bf16.msra.mxu0 %v241
    %309 = vmatprep.subr.bf16.mxu0 %v240
    %310 = vmatpush1.bf16.msra.mxu0 %v239
    %311 = vmatprep.subr.bf16.mxu0 %v238
    %312 = vmatpush1.bf16.msra.mxu0 %v237
    %313 = vmatprep.subr.bf16.mxu0 %v236
    %314 = vmatpush1.bf16.msra.mxu0 %v235
    %315 = vmatprep.subr.bf16.mxu0 %v266
    %316 = vmatpush2.bf16.msra.mxu0 %v265
    %317 = vmatprep.subr.bf16.mxu0 %v264
    %318 = vmatpush2.bf16.msra.mxu0 %v263
    %319 = vmatprep.subr.bf16.mxu0 %v262
    %320 = vmatpush2.bf16.msra.mxu0 %v261
    %321 = vmatprep.subr.bf16.mxu0 %v260
    %322 = vmatpush2.bf16.msra.mxu0 %v259
    %323 = vmatprep.subr.bf16.mxu0 %v258
    %324 = vmatpush2.bf16.msra.mxu0 %v257
    %325 = vmatprep.subr.bf16.mxu0 %v256
    %326 = vmatpush2.bf16.msra.mxu0 %v255
    %327 = vmatprep.subr.bf16.mxu0 %v254
    %328 = vmatpush2.bf16.msra.mxu0 %v253
    %329 = vmatprep.subr.bf16.mxu0 %v252
    %330 = vmatpush2.bf16.msra.mxu0 %v251
    %331 = vmatprep.mubr.bf16.mxu0 %v138
    %332 = vmatmul.mubr.bf16.gmra.mxu0 %v137
    %v333 = vpop.f32.mrf.mxu0
    %v334 = vadd.f32 0.0, %v333
    %v335 = vpop.f32.mrf.mxu0
    %v336 = vadd.f32 0.0, %v335
    %v337 = vpop.f32.mrf.mxu0
    %v338 = vpop.f32.mrf.mxu0
    %339 = vdwg.mxu0
    %v340 = vand.u32 2147483647, %v334
    %v341 = vand.u32 2147483647, %v336
    %v342 = vadd.f32 %v340, 1.0
    %v343 = vadd.f32 %v341, 1.0
    %v344 = vrcp.pop %v342
    %v345 = vrcp.pop %v343
    %v346 = vmul.f32 %v334, %v344
    %v347 = vmul.f32 %v336, %v345
    %v348 = vld [vmem:[#allocation2 + $0x120] sm:$0xff]
    %v349 = vld [vmem:[#allocation2 + $0x128] sm:$0xff]
    %v350 = vld [vmem:[#allocation2 + $0x130] sm:$0xff]
    %v351 = vld [vmem:[#allocation2 + $0x138] sm:$0xff]
    %v352 = vld [vmem:[#allocation2 + $0x140] sm:$0xff]
    %v353 = vld [vmem:[#allocation2 + $0x148] sm:$0xff]
    %v354 = vld [vmem:[#allocation2 + $0x150] sm:$0xff]
    %v355 = vld [vmem:[#allocation2 + $0x158] sm:$0xff]
    %v356 = vld [vmem:[#allocation2 + $0x160] sm:$0xff]
    %v357 = vld [vmem:[#allocation2 + $0x168] sm:$0xff]
    %v358 = vld [vmem:[#allocation2 + $0x170] sm:$0xff]
    %v359 = vld [vmem:[#allocation2 + $0x178] sm:$0xff]
    %v360 = vld [vmem:[#allocation2 + $0x180] sm:$0xff]
    %v361 = vld [vmem:[#allocation2 + $0x188] sm:$0xff]
    %v362 = vld [vmem:[#allocation2 + $0x190] sm:$0xff]
    %v363 = vld [vmem:[#allocation2 + $0x198] sm:$0xff]
    %v364 = vld [vmem:[#allocation2 + $0x1a0] sm:$0xff]
    %v365 = vld [vmem:[#allocation2 + $0x1a8] sm:$0xff]
    %v366 = vld [vmem:[#allocation2 + $0x1b0] sm:$0xff]
    %v367 = vld [vmem:[#allocation2 + $0x1b8] sm:$0xff]
    %v368 = vld [vmem:[#allocation2 + $0x1c0] sm:$0xff]
    %v369 = vld [vmem:[#allocation2 + $0x1c8] sm:$0xff]
    %v370 = vld [vmem:[#allocation2 + $0x1d0] sm:$0xff]
    %v371 = vld [vmem:[#allocation2 + $0x1d8] sm:$0xff]
    %v372 = vld [vmem:[#allocation2 + $0x1e0] sm:$0xff]
    %v373 = vld [vmem:[#allocation2 + $0x1e8] sm:$0xff]
    %v374 = vld [vmem:[#allocation2 + $0x1f0] sm:$0xff]
    %v375 = vld [vmem:[#allocation2 + $0x1f8] sm:$0xff]
    %v376 = vld [vmem:[#allocation2 + $0x200] sm:$0xff]
    %v377 = vld [vmem:[#allocation2 + $0x208] sm:$0xff]
    %v378 = vld [vmem:[#allocation2 + $0x210] sm:$0xff]
    %v379 = vld [vmem:[#allocation2 + $0x218] sm:$0xff]
    %v380 = vpack.c.bf16 %v346, %v346
    %v381 = vpack.c.bf16 %v347, %v347
    %v414 = vunpack.c.l.b16 %v348
    %v415 = vunpack.c.h.b16 %v348
    %v416 = vunpack.c.l.b16 %v349
    %v417 = vunpack.c.h.b16 %v349
    %v418 = vunpack.c.l.b16 %v350
    %v419 = vunpack.c.h.b16 %v350
    %v420 = vunpack.c.l.b16 %v351
    %v421 = vunpack.c.h.b16 %v351
    %v422 = vunpack.c.l.b16 %v352
    %v423 = vunpack.c.h.b16 %v352
    %v424 = vunpack.c.l.b16 %v353
    %v425 = vunpack.c.h.b16 %v353
    %v426 = vunpack.c.l.b16 %v354
    %v427 = vunpack.c.h.b16 %v354
    %v428 = vunpack.c.l.b16 %v355
    %v429 = vunpack.c.h.b16 %v355
    %v430 = vunpack.c.l.b16 %v356
    %v431 = vunpack.c.h.b16 %v356
    %v432 = vunpack.c.l.b16 %v357
    %v433 = vunpack.c.h.b16 %v357
    %v434 = vunpack.c.l.b16 %v358
    %v435 = vunpack.c.h.b16 %v358
    %v436 = vunpack.c.l.b16 %v359
    %v437 = vunpack.c.h.b16 %v359
    %v438 = vunpack.c.l.b16 %v360
    %v439 = vunpack.c.h.b16 %v360
    %v440 = vunpack.c.l.b16 %v361
    %v441 = vunpack.c.h.b16 %v361
    %v442 = vunpack.c.l.b16 %v362
    %v443 = vunpack.c.h.b16 %v362
    %v444 = vunpack.c.l.b16 %v363
    %v445 = vunpack.c.h.b16 %v363
    %v446 = vunpack.c.l.b16 %v364
    %v447 = vunpack.c.h.b16 %v364
    %v448 = vunpack.c.l.b16 %v365
    %v449 = vunpack.c.h.b16 %v365
    %v450 = vunpack.c.l.b16 %v366
    %v451 = vunpack.c.h.b16 %v366
    %v452 = vunpack.c.l.b16 %v367
    %v453 = vunpack.c.h.b16 %v367
    %v454 = vunpack.c.l.b16 %v368
    %v455 = vunpack.c.h.b16 %v368
    %v456 = vunpack.c.l.b16 %v369
    %v457 = vunpack.c.h.b16 %v369
    %v458 = vunpack.c.l.b16 %v370
    %v459 = vunpack.c.h.b16 %v370
    %v460 = vunpack.c.l.b16 %v371
    %v461 = vunpack.c.h.b16 %v371
    %v462 = vunpack.c.l.b16 %v372
    %v463 = vunpack.c.h.b16 %v372
    %v464 = vunpack.c.l.b16 %v373
    %v465 = vunpack.c.h.b16 %v373
    %v466 = vunpack.c.l.b16 %v374
    %v467 = vunpack.c.h.b16 %v374
    %v468 = vunpack.c.l.b16 %v375
    %v469 = vunpack.c.h.b16 %v375
    %v470 = vunpack.c.l.b16 %v376
    %v471 = vunpack.c.h.b16 %v376
    %v472 = vunpack.c.l.b16 %v377
    %v473 = vunpack.c.h.b16 %v377
    %v474 = vunpack.c.l.b16 %v378
    %v475 = vunpack.c.h.b16 %v378
    %v476 = vunpack.c.l.b16 %v379
    %v477 = vunpack.c.h.b16 %v379
    %v478 = vpack.c.b16 %v416, %v414
    %v479 = vpack.c.b16 %v417, %v415
    %v480 = vpack.c.b16 %v420, %v418
    %v481 = vpack.c.b16 %v421, %v419
    %v482 = vpack.c.b16 %v424, %v422
    %v483 = vpack.c.b16 %v425, %v423
    %v484 = vpack.c.b16 %v428, %v426
    %v485 = vpack.c.b16 %v429, %v427
    %v486 = vpack.c.b16 %v432, %v430
    %v487 = vpack.c.b16 %v433, %v431
    %v488 = vpack.c.b16 %v436, %v434
    %v489 = vpack.c.b16 %v437, %v435
    %v490 = vpack.c.b16 %v440, %v438
    %v491 = vpack.c.b16 %v441, %v439
    %v492 = vpack.c.b16 %v444, %v442
    %v493 = vpack.c.b16 %v445, %v443
    %v494 = vpack.c.b16 %v448, %v446
    %v495 = vpack.c.b16 %v449, %v447
    %v496 = vpack.c.b16 %v452, %v450
    %v497 = vpack.c.b16 %v453, %v451
    %v498 = vpack.c.b16 %v456, %v454
    %v499 = vpack.c.b16 %v457, %v455
    %v500 = vpack.c.b16 %v460, %v458
    %v501 = vpack.c.b16 %v461, %v459
    %v502 = vpack.c.b16 %v464, %v462
    %v503 = vpack.c.b16 %v465, %v463
    %v504 = vpack.c.b16 %v468, %v466
    %v505 = vpack.c.b16 %v469, %v467
    %v506 = vpack.c.b16 %v472, %v470
    %v507 = vpack.c.b16 %v473, %v471
    %v508 = vpack.c.b16 %v476, %v474
    %v509 = vpack.c.b16 %v477, %v475
    %542 = vmatprep.subr.bf16.mxu0 %v493
    %543 = vmatpush1.bf16.msra.mxu0 %v492
    %544 = vmatprep.subr.bf16.mxu0 %v491
    %545 = vmatpush1.bf16.msra.mxu0 %v490
    %546 = vmatprep.subr.bf16.mxu0 %v489
    %547 = vmatpush1.bf16.msra.mxu0 %v488
    %548 = vmatprep.subr.bf16.mxu0 %v487
    %549 = vmatpush1.bf16.msra.mxu0 %v486
    %550 = vmatprep.subr.bf16.mxu0 %v485
    %551 = vmatpush1.bf16.msra.mxu0 %v484
    %552 = vmatprep.subr.bf16.mxu0 %v483
    %553 = vmatpush1.bf16.msra.mxu0 %v482
    %554 = vmatprep.subr.bf16.mxu0 %v481
    %555 = vmatpush1.bf16.msra.mxu0 %v480
    %556 = vmatprep.subr.bf16.mxu0 %v479
    %557 = vmatpush1.bf16.msra.mxu0 %v478
    %558 = vmatprep.subr.bf16.mxu0 %v509
    %559 = vmatpush2.bf16.msra.mxu0 %v508
    %560 = vmatprep.subr.bf16.mxu0 %v507
    %561 = vmatpush2.bf16.msra.mxu0 %v506
    %562 = vmatprep.subr.bf16.mxu0 %v505
    %563 = vmatpush2.bf16.msra.mxu0 %v504
    %564 = vmatprep.subr.bf16.mxu0 %v503
    %565 = vmatpush2.bf16.msra.mxu0 %v502
    %566 = vmatprep.subr.bf16.mxu0 %v501
    %567 = vmatpush2.bf16.msra.mxu0 %v500
    %568 = vmatprep.subr.bf16.mxu0 %v499
    %569 = vmatpush2.bf16.msra.mxu0 %v498
    %570 = vmatprep.subr.bf16.mxu0 %v497
    %571 = vmatpush2.bf16.msra.mxu0 %v496
    %572 = vmatprep.subr.bf16.mxu0 %v495
    %573 = vmatpush2.bf16.msra.mxu0 %v494
    %574 = vmatprep.mubr.bf16.mxu0 %v381
    %575 = vmatmul.mubr.bf16.gmra.mxu0 %v380
    %v576 = vpop.f32.mrf.mxu0
    %v577 = vadd.f32 0.0, %v576
    %v578 = vpop.f32.mrf.mxu0
    %v579 = vadd.f32 0.0, %v578
    %v580 = vpop.f32.mrf.mxu0
    %v581 = vpop.f32.mrf.mxu0
    %582 = vdwg.mxu0
    %v583 = vand.u32 2147483647, %v577
    %v584 = vand.u32 2147483647, %v579
    %v585 = vadd.f32 %v583, 1.0
    %v586 = vadd.f32 %v584, 1.0
    %v587 = vrcp.pop %v585
    %v588 = vrcp.pop %v586
    %v589 = vmul.f32 %v577, %v587
    %v590 = vmul.f32 %v579, %v588
    %v591 = vld [vmem:[#allocation2 + $0x220] sm:$0xff]
    %v592 = vld [vmem:[#allocation2 + $0x228] sm:$0xff]
    %v593 = vld [vmem:[#allocation2 + $0x230] sm:$0xff]
    %v594 = vld [vmem:[#allocation2 + $0x238] sm:$0xff]
    %v595 = vld [vmem:[#allocation2 + $0x240] sm:$0xff]
    %v596 = vld [vmem:[#allocation2 + $0x248] sm:$0xff]
    %v597 = vld [vmem:[#allocation2 + $0x250] sm:$0xff]
    %v598 = vld [vmem:[#allocation2 + $0x258] sm:$0xff]
    %v599 = vld [vmem:[#allocation2 + $0x260] sm:$0xff]
    %v600 = vld [vmem:[#allocation2 + $0x268] sm:$0xff]
    %v601 = vld [vmem:[#allocation2 + $0x270] sm:$0xff]
    %v602 = vld [vmem:[#allocation2 + $0x278] sm:$0xff]
    %v603 = vld [vmem:[#allocation2 + $0x280] sm:$0xff]
    %v604 = vld [vmem:[#allocation2 + $0x288] sm:$0xff]
    %v605 = vld [vmem:[#allocation2 + $0x290] sm:$0xff]
    %v606 = vld [vmem:[#allocation2 + $0x298] sm:$0xff]
    %v607 = vld [vmem:[#allocation2 + $0x2a0] sm:$0xff]
    %v608 = vld [vmem:[#allocation2 + $0x2a8] sm:$0xff]
    %v609 = vld [vmem:[#allocation2 + $0x2b0] sm:$0xff]
    %v610 = vld [vmem:[#allocation2 + $0x2b8] sm:$0xff]
    %v611 = vld [vmem:[#allocation2 + $0x2c0] sm:$0xff]
    %v612 = vld [vmem:[#allocation2 + $0x2c8] sm:$0xff]
    %v613 = vld [vmem:[#allocation2 + $0x2d0] sm:$0xff]
    %v614 = vld [vmem:[#allocation2 + $0x2d8] sm:$0xff]
    %v615 = vld [vmem:[#allocation2 + $0x2e0] sm:$0xff]
    %v616 = vld [vmem:[#allocation2 + $0x2e8] sm:$0xff]
    %v617 = vld [vmem:[#allocation2 + $0x2f0] sm:$0xff]
    %v618 = vld [vmem:[#allocation2 + $0x2f8] sm:$0xff]
    %v619 = vld [vmem:[#allocation2 + $0x300] sm:$0xff]
    %v620 = vld [vmem:[#allocation2 + $0x308] sm:$0xff]
    %v621 = vld [vmem:[#allocation2 + $0x310] sm:$0xff]
    %v622 = vld [vmem:[#allocation2 + $0x318] sm:$0xff]
    %v623 = vpack.c.bf16 %v589, %v589
    %v624 = vpack.c.bf16 %v590, %v590
    %v657 = vunpack.c.l.b16 %v591
    %v658 = vunpack.c.h.b16 %v591
    %v659 = vunpack.c.l.b16 %v592
    %v660 = vunpack.c.h.b16 %v592
    %v661 = vunpack.c.l.b16 %v593
    %v662 = vunpack.c.h.b16 %v593
    %v663 = vunpack.c.l.b16 %v594
    %v664 = vunpack.c.h.b16 %v594
    %v665 = vunpack.c.l.b16 %v595
    %v666 = vunpack.c.h.b16 %v595
    %v667 = vunpack.c.l.b16 %v596
    %v668 = vunpack.c.h.b16 %v596
    %v669 = vunpack.c.l.b16 %v597
    %v670 = vunpack.c.h.b16 %v597
    %v671 = vunpack.c.l.b16 %v598
    %v672 = vunpack.c.h.b16 %v598
    %v673 = vunpack.c.l.b16 %v599
    %v674 = vunpack.c.h.b16 %v599
    %v675 = vunpack.c.l.b16 %v600
    %v676 = vunpack.c.h.b16 %v600
    %v677 = vunpack.c.l.b16 %v601
    %v678 = vunpack.c.h.b16 %v601
    %v679 = vunpack.c.l.b16 %v602
    %v680 = vunpack.c.h.b16 %v602
    %v681 = vunpack.c.l.b16 %v603
    %v682 = vunpack.c.h.b16 %v603
    %v683 = vunpack.c.l.b16 %v604
    %v684 = vunpack.c.h.b16 %v604
    %v685 = vunpack.c.l.b16 %v605
    %v686 = vunpack.c.h.b16 %v605
    %v687 = vunpack.c.l.b16 %v606
    %v688 = vunpack.c.h.b16 %v606
    %v689 = vunpack.c.l.b16 %v607
    %v690 = vunpack.c.h.b16 %v607
    %v691 = vunpack.c.l.b16 %v608
    %v692 = vunpack.c.h.b16 %v608
    %v693 = vunpack.c.l.b16 %v609
    %v694 = vunpack.c.h.b16 %v609
    %v695 = vunpack.c.l.b16 %v610
    %v696 = vunpack.c.h.b16 %v610
    %v697 = vunpack.c.l.b16 %v611
    %v698 = vunpack.c.h.b16 %v611
    %v699 = vunpack.c.l.b16 %v612
    %v700 = vunpack.c.h.b16 %v612
    %v701 = vunpack.c.l.b16 %v613
    %v702 = vunpack.c.h.b16 %v613
    %v703 = vunpack.c.l.b16 %v614
    %v704 = vunpack.c.h.b16 %v614
    %v705 = vunpack.c.l.b16 %v615
    %v706 = vunpack.c.h.b16 %v615
    %v707 = vunpack.c.l.b16 %v616
    %v708 = vunpack.c.h.b16 %v616
    %v709 = vunpack.c.l.b16 %v617
    %v710 = vunpack.c.h.b16 %v617
    %v711 = vunpack.c.l.b16 %v618
    %v712 = vunpack.c.h.b16 %v618
    %v713 = vunpack.c.l.b16 %v619
    %v714 = vunpack.c.h.b16 %v619
    %v715 = vunpack.c.l.b16 %v620
    %v716 = vunpack.c.h.b16 %v620
    %v717 = vunpack.c.l.b16 %v621
    %v718 = vunpack.c.h.b16 %v621
    %v719 = vunpack.c.l.b16 %v622
    %v720 = vunpack.c.h.b16 %v622
    %v721 = vpack.c.b16 %v659, %v657
    %v722 = vpack.c.b16 %v660, %v658
    %v723 = vpack.c.b16 %v663, %v661
    %v724 = vpack.c.b16 %v664, %v662
    %v725 = vpack.c.b16 %v667, %v665
    %v726 = vpack.c.b16 %v668, %v666
    %v727 = vpack.c.b16 %v671, %v669
    %v728 = vpack.c.b16 %v672, %v670
    %v729 = vpack.c.b16 %v675, %v673
    %v730 = vpack.c.b16 %v676, %v674
    %v731 = vpack.c.b16 %v679, %v677
    %v732 = vpack.c.b16 %v680, %v678
    %v733 = vpack.c.b16 %v683, %v681
    %v734 = vpack.c.b16 %v684, %v682
    %v735 = vpack.c.b16 %v687, %v685
    %v736 = vpack.c.b16 %v688, %v686
    %v737 = vpack.c.b16 %v691, %v689
    %v738 = vpack.c.b16 %v692, %v690
    %v739 = vpack.c.b16 %v695, %v693
    %v740 = vpack.c.b16 %v696, %v694
    %v741 = vpack.c.b16 %v699, %v697
    %v742 = vpack.c.b16 %v700, %v698
    %v743 = vpack.c.b16 %v703, %v701
    %v744 = vpack.c.b16 %v704, %v702
    %v745 = vpack.c.b16 %v707, %v705
    %v746 = vpack.c.b16 %v708, %v706
    %v747 = vpack.c.b16 %v711, %v709
    %v748 = vpack.c.b16 %v712, %v710
    %v749 = vpack.c.b16 %v715, %v713
    %v750 = vpack.c.b16 %v716, %v714
    %v751 = vpack.c.b16 %v719, %v717
    %v752 = vpack.c.b16 %v720, %v718
    %785 = vmatprep.subr.bf16.mxu0 %v736
    %786 = vmatpush1.bf16.msra.mxu0 %v735
    %787 = vmatprep.subr.bf16.mxu0 %v734
    %788 = vmatpush1.bf16.msra.mxu0 %v733
    %789 = vmatprep.subr.bf16.mxu0 %v732
    %790 = vmatpush1.bf16.msra.mxu0 %v731
    %791 = vmatprep.subr.bf16.mxu0 %v730
    %792 = vmatpush1.bf16.msra.mxu0 %v729
    %793 = vmatprep.subr.bf16.mxu0 %v728
    %794 = vmatpush1.bf16.msra.mxu0 %v727
    %795 = vmatprep.subr.bf16.mxu0 %v726
    %796 = vmatpush1.bf16.msra.mxu0 %v725
    %797 = vmatprep.subr.bf16.mxu0 %v724
    %798 = vmatpush1.bf16.msra.mxu0 %v723
    %799 = vmatprep.subr.bf16.mxu0 %v722
    %800 = vmatpush1.bf16.msra.mxu0 %v721
    %801 = vmatprep.subr.bf16.mxu0 %v752
    %802 = vmatpush2.bf16.msra.mxu0 %v751
    %803 = vmatprep.subr.bf16.mxu0 %v750
    %804 = vmatpush2.bf16.msra.mxu0 %v749
    %805 = vmatprep.subr.bf16.mxu0 %v748
    %806 = vmatpush2.bf16.msra.mxu0 %v747
    %807 = vmatprep.subr.bf16.mxu0 %v746
    %808 = vmatpush2.bf16.msra.mxu0 %v745
    %809 = vmatprep.subr.bf16.mxu0 %v744
    %810 = vmatpush2.bf16.msra.mxu0 %v743
    %811 = vmatprep.subr.bf16.mxu0 %v742
    %812 = vmatpush2.bf16.msra.mxu0 %v741
    %813 = vmatprep.subr.bf16.mxu0 %v740
    %814 = vmatpush2.bf16.msra.mxu0 %v739
    %815 = vmatprep.subr.bf16.mxu0 %v738
    %816 = vmatpush2.bf16.msra.mxu0 %v737
    %817 = vmatprep.mubr.bf16.mxu0 %v624
    %818 = vmatmul.mubr.bf16.gmra.mxu0 %v623
    %v819 = vpop.f32.mrf.mxu0
    %v820 = vadd.f32 0.0, %v819
    %v821 = vpop.f32.mrf.mxu0
    %v822 = vadd.f32 0.0, %v821
    %v823 = vpop.f32.mrf.mxu0
    %v824 = vpop.f32.mrf.mxu0
    %825 = vdwg.mxu0
    %v826 = vmax.f32 %v820, 0.0
    %v827 = vmax.f32 %v822, 0.0
    %v828 = vld [vmem:[#allocation2 + $0x320] sm:$0xff]
    %v829 = vld [vmem:[#allocation2 + $0x328] sm:$0xff]
    %v830 = vld [vmem:[#allocation2 + $0x330] sm:$0xff]
    %v831 = vld [vmem:[#allocation2 + $0x338] sm:$0xff]
    %v832 = vld [vmem:[#allocation2 + $0x340] sm:$0xff]
    %v833 = vld [vmem:[#allocation2 + $0x348] sm:$0xff]
    %v834 = vld [vmem:[#allocation2 + $0x350] sm:$0xff]
    %v835 = vld [vmem:[#allocation2 + $0x358] sm:$0xff]
    %v836 = vld [vmem:[#allocation2 + $0x360] sm:$0xff]
    %v837 = vld [vmem:[#allocation2 + $0x368] sm:$0xff]
    %v838 = vld [vmem:[#allocation2 + $0x370] sm:$0xff]
    %v839 = vld [vmem:[#allocation2 + $0x378] sm:$0xff]
    %v840 = vld [vmem:[#allocation2 + $0x380] sm:$0xff]
    %v841 = vld [vmem:[#allocation2 + $0x388] sm:$0xff]
    %v842 = vld [vmem:[#allocation2 + $0x390] sm:$0xff]
    %v843 = vld [vmem:[#allocation2 + $0x398] sm:$0xff]
    %v844 = vld [vmem:[#allocation2 + $0x3a0] sm:$0xff]
    %v845 = vld [vmem:[#allocation2 + $0x3a8] sm:$0xff]
    %v846 = vld [vmem:[#allocation2 + $0x3b0] sm:$0xff]
    %v847 = vld [vmem:[#allocation2 + $0x3b8] sm:$0xff]
    %v848 = vld [vmem:[#allocation2 + $0x3c0] sm:$0xff]
    %v849 = vld [vmem:[#allocation2 + $0x3c8] sm:$0xff]
    %v850 = vld [vmem:[#allocation2 + $0x3d0] sm:$0xff]
    %v851 = vld [vmem:[#allocation2 + $0x3d8] sm:$0xff]
    %v852 = vld [vmem:[#allocation2 + $0x3e0] sm:$0xff]
    %v853 = vld [vmem:[#allocation2 + $0x3e8] sm:$0xff]
    %v854 = vld [vmem:[#allocation2 + $0x3f0] sm:$0xff]
    %v855 = vld [vmem:[#allocation2 + $0x3f8] sm:$0xff]
    %v856 = vld [vmem:[#allocation2 + $0x400] sm:$0xff]
    %v857 = vld [vmem:[#allocation2 + $0x408] sm:$0xff]
    %v858 = vld [vmem:[#allocation2 + $0x410] sm:$0xff]
    %v859 = vld [vmem:[#allocation2 + $0x418] sm:$0xff]
    %v860 = vpack.c.bf16 %v826, %v826
    %v861 = vpack.c.bf16 %v827, %v827
    %v894 = vunpack.c.l.b16 %v828
    %v895 = vunpack.c.h.b16 %v828
    %v896 = vunpack.c.l.b16 %v829
    %v897 = vunpack.c.h.b16 %v829
    %v898 = vunpack.c.l.b16 %v830
    %v899 = vunpack.c.h.b16 %v830
    %v900 = vunpack.c.l.b16 %v831
    %v901 = vunpack.c.h.b16 %v831
    %v902 = vunpack.c.l.b16 %v832
    %v903 = vunpack.c.h.b16 %v832
    %v904 = vunpack.c.l.b16 %v833
    %v905 = vunpack.c.h.b16 %v833
    %v906 = vunpack.c.l.b16 %v834
    %v907 = vunpack.c.h.b16 %v834
    %v908 = vunpack.c.l.b16 %v835
    %v909 = vunpack.c.h.b16 %v835
    %v910 = vunpack.c.l.b16 %v836
    %v911 = vunpack.c.h.b16 %v836
    %v912 = vunpack.c.l.b16 %v837
    %v913 = vunpack.c.h.b16 %v837
    %v914 = vunpack.c.l.b16 %v838
    %v915 = vunpack.c.h.b16 %v838
    %v916 = vunpack.c.l.b16 %v839
    %v917 = vunpack.c.h.b16 %v839
    %v918 = vunpack.c.l.b16 %v840
    %v919 = vunpack.c.h.b16 %v840
    %v920 = vunpack.c.l.b16 %v841
    %v921 = vunpack.c.h.b16 %v841
    %v922 = vunpack.c.l.b16 %v842
    %v923 = vunpack.c.h.b16 %v842
    %v924 = vunpack.c.l.b16 %v843
    %v925 = vunpack.c.h.b16 %v843
    %v926 = vunpack.c.l.b16 %v844
    %v927 = vunpack.c.h.b16 %v844
    %v928 = vunpack.c.l.b16 %v845
    %v929 = vunpack.c.h.b16 %v845
    %v930 = vunpack.c.l.b16 %v846
    %v931 = vunpack.c.h.b16 %v846
    %v932 = vunpack.c.l.b16 %v847
    %v933 = vunpack.c.h.b16 %v847
    %v934 = vunpack.c.l.b16 %v848
    %v935 = vunpack.c.h.b16 %v848
    %v936 = vunpack.c.l.b16 %v849
    %v937 = vunpack.c.h.b16 %v849
    %v938 = vunpack.c.l.b16 %v850
    %v939 = vunpack.c.h.b16 %v850
    %v940 = vunpack.c.l.b16 %v851
    %v941 = vunpack.c.h.b16 %v851
    %v942 = vunpack.c.l.b16 %v852
    %v943 = vunpack.c.h.b16 %v852
    %v944 = vunpack.c.l.b16 %v853
    %v945 = vunpack.c.h.b16 %v853
    %v946 = vunpack.c.l.b16 %v854
    %v947 = vunpack.c.h.b16 %v854
    %v948 = vunpack.c.l.b16 %v855
    %v949 = vunpack.c.h.b16 %v855
    %v950 = vunpack.c.l.b16 %v856
    %v951 = vunpack.c.h.b16 %v856
    %v952 = vunpack.c.l.b16 %v857
    %v953 = vunpack.c.h.b16 %v857
    %v954 = vunpack.c.l.b16 %v858
    %v955 = vunpack.c.h.b16 %v858
    %v956 = vunpack.c.l.b16 %v859
    %v957 = vunpack.c.h.b16 %v859
    %v958 = vpack.c.b16 %v896, %v894
    %v959 = vpack.c.b16 %v897, %v895
    %v960 = vpack.c.b16 %v900, %v898
    %v961 = vpack.c.b16 %v901, %v899
    %v962 = vpack.c.b16 %v904, %v902
    %v963 = vpack.c.b16 %v905, %v903
    %v964 = vpack.c.b16 %v908, %v906
    %v965 = vpack.c.b16 %v909, %v907
    %v966 = vpack.c.b16 %v912, %v910
    %v967 = vpack.c.b16 %v913, %v911
    %v968 = vpack.c.b16 %v916, %v914
    %v969 = vpack.c.b16 %v917, %v915
    %v970 = vpack.c.b16 %v920, %v918
    %v971 = vpack.c.b16 %v921, %v919
    %v972 = vpack.c.b16 %v924, %v922
    %v973 = vpack.c.b16 %v925, %v923
    %v974 = vpack.c.b16 %v928, %v926
    %v975 = vpack.c.b16 %v929, %v927
    %v976 = vpack.c.b16 %v932, %v930
    %v977 = vpack.c.b16 %v933, %v931
    %v978 = vpack.c.b16 %v936, %v934
    %v979 = vpack.c.b16 %v937, %v935
    %v980 = vpack.c.b16 %v940, %v938
    %v981 = vpack.c.b16 %v941, %v939
    %v982 = vpack.c.b16 %v944, %v942
    %v983 = vpack.c.b16 %v945, %v943
    %v984 = vpack.c.b16 %v948, %v946
    %v985 = vpack.c.b16 %v949, %v947
    %v986 = vpack.c.b16 %v952, %v950
    %v987 = vpack.c.b16 %v953, %v951
    %v988 = vpack.c.b16 %v956, %v954
    %v989 = vpack.c.b16 %v957, %v955
    %1022 = vmatprep.subr.bf16.mxu0 %v973
    %1023 = vmatpush1.bf16.msra.mxu0 %v972
    %1024 = vmatprep.subr.bf16.mxu0 %v971
    %1025 = vmatpush1.bf16.msra.mxu0 %v970
    %1026 = vmatprep.subr.bf16.mxu0 %v969
    %1027 = vmatpush1.bf16.msra.mxu0 %v968
    %1028 = vmatprep.subr.bf16.mxu0 %v967
    %1029 = vmatpush1.bf16.msra.mxu0 %v966
    %1030 = vmatprep.subr.bf16.mxu0 %v965
    %1031 = vmatpush1.bf16.msra.mxu0 %v964
    %1032 = vmatprep.subr.bf16.mxu0 %v963
    %1033 = vmatpush1.bf16.msra.mxu0 %v962
    %1034 = vmatprep.subr.bf16.mxu0 %v961
    %1035 = vmatpush1.bf16.msra.mxu0 %v960
    %1036 = vmatprep.subr.bf16.mxu0 %v959
    %1037 = vmatpush1.bf16.msra.mxu0 %v958
    %1038 = vmatprep.subr.bf16.mxu0 %v989
    %1039 = vmatpush2.bf16.msra.mxu0 %v988
    %1040 = vmatprep.subr.bf16.mxu0 %v987
    %1041 = vmatpush2.bf16.msra.mxu0 %v986
    %1042 = vmatprep.subr.bf16.mxu0 %v985
    %1043 = vmatpush2.bf16.msra.mxu0 %v984
    %1044 = vmatprep.subr.bf16.mxu0 %v983
    %1045 = vmatpush2.bf16.msra.mxu0 %v982
    %1046 = vmatprep.subr.bf16.mxu0 %v981
    %1047 = vmatpush2.bf16.msra.mxu0 %v980
    %1048 = vmatprep.subr.bf16.mxu0 %v979
    %1049 = vmatpush2.bf16.msra.mxu0 %v978
    %1050 = vmatprep.subr.bf16.mxu0 %v977
    %1051 = vmatpush2.bf16.msra.mxu0 %v976
    %1052 = vmatprep.subr.bf16.mxu0 %v975
    %1053 = vmatpush2.bf16.msra.mxu0 %v974
    %1054 = vmatprep.mubr.bf16.mxu0 %v861
    %1055 = vmatmul.mubr.bf16.gmra.mxu0 %v860
    %v1056 = vpop.f32.mrf.mxu0
    %v1057 = vadd.f32 0.0, %v1056
    %v1058 = vpop.f32.mrf.mxu0
    %v1059 = vadd.f32 0.0, %v1058
    %v1060 = vpop.f32.mrf.mxu0
    %v1061 = vpop.f32.mrf.mxu0
    %1062 = vdwg.mxu0
    %v1063 = vmax.f32 %v1057, 0.0
    %v1064 = vmax.f32 %v1059, 0.0
    %v1065 = vld [vmem:[#allocation2 + $0x420] sm:$0xff]
    %v1066 = vld [vmem:[#allocation2 + $0x428] sm:$0xff]
    %v1067 = vld [vmem:[#allocation2 + $0x430] sm:$0xff]
    %v1068 = vld [vmem:[#allocation2 + $0x438] sm:$0xff]
    %v1069 = vld [vmem:[#allocation2 + $0x440] sm:$0xff]
    %v1070 = vld [vmem:[#allocation2 + $0x448] sm:$0xff]
    %v1071 = vld [vmem:[#allocation2 + $0x450] sm:$0xff]
    %v1072 = vld [vmem:[#allocation2 + $0x458] sm:$0xff]
    %v1073 = vld [vmem:[#allocation2 + $0x460] sm:$0xff]
    %v1074 = vld [vmem:[#allocation2 + $0x468] sm:$0xff]
    %v1075 = vld [vmem:[#allocation2 + $0x470] sm:$0xff]
    %v1076 = vld [vmem:[#allocation2 + $0x478] sm:$0xff]
    %v1077 = vld [vmem:[#allocation2 + $0x480] sm:$0xff]
    %v1078 = vld [vmem:[#allocation2 + $0x488] sm:$0xff]
    %v1079 = vld [vmem:[#allocation2 + $0x490] sm:$0xff]
    %v1080 = vld [vmem:[#allocation2 + $0x498] sm:$0xff]
    %v1081 = vld [vmem:[#allocation2 + $0x4a0] sm:$0xff]
    %v1082 = vld [vmem:[#allocation2 + $0x4a8] sm:$0xff]
    %v1083 = vld [vmem:[#allocation2 + $0x4b0] sm:$0xff]
    %v1084 = vld [vmem:[#allocation2 + $0x4b8] sm:$0xff]
    %v1085 = vld [vmem:[#allocation2 + $0x4c0] sm:$0xff]
    %v1086 = vld [vmem:[#allocation2 + $0x4c8] sm:$0xff]
    %v1087 = vld [vmem:[#allocation2 + $0x4d0] sm:$0xff]
    %v1088 = vld [vmem:[#allocation2 + $0x4d8] sm:$0xff]
    %v1089 = vld [vmem:[#allocation2 + $0x4e0] sm:$0xff]
    %v1090 = vld [vmem:[#allocation2 + $0x4e8] sm:$0xff]
    %v1091 = vld [vmem:[#allocation2 + $0x4f0] sm:$0xff]
    %v1092 = vld [vmem:[#allocation2 + $0x4f8] sm:$0xff]
    %v1093 = vld [vmem:[#allocation2 + $0x500] sm:$0xff]
    %v1094 = vld [vmem:[#allocation2 + $0x508] sm:$0xff]
    %v1095 = vld [vmem:[#allocation2 + $0x510] sm:$0xff]
    %v1096 = vld [vmem:[#allocation2 + $0x518] sm:$0xff]
    %v1097 = vpack.c.bf16 %v1063, %v1063
    %v1098 = vpack.c.bf16 %v1064, %v1064
    %v1099 = vld [vmem:[#allocation2 + $0x520] sm:$0x11]
    %v1100 = vunpack.c.l.bf16 %v1099
    %v1101 = vunpack.c.h.bf16 %v1099
    %v1102 = vlaneseq
    %v1103 = vshrl.u32 %v1102, 7
    %v1104 = vsub.s32 0, %v1103
    %v1105 = vrot.slane %v1100, %v1104
    %v1106 = vlaneseq
    %v1107 = vshrl.u32 %v1106, 7
    %v1108 = vsub.s32 0, %v1107
    %v1109 = vrot.slane %v1101, %v1108
    %v1142 = vunpack.c.l.b16 %v1065
    %v1143 = vunpack.c.h.b16 %v1065
    %v1144 = vunpack.c.l.b16 %v1066
    %v1145 = vunpack.c.h.b16 %v1066
    %v1146 = vunpack.c.l.b16 %v1067
    %v1147 = vunpack.c.h.b16 %v1067
    %v1148 = vunpack.c.l.b16 %v1068
    %v1149 = vunpack.c.h.b16 %v1068
    %v1150 = vunpack.c.l.b16 %v1069
    %v1151 = vunpack.c.h.b16 %v1069
    %v1152 = vunpack.c.l.b16 %v1070
    %v1153 = vunpack.c.h.b16 %v1070
    %v1154 = vunpack.c.l.b16 %v1071
    %v1155 = vunpack.c.h.b16 %v1071
    %v1156 = vunpack.c.l.b16 %v1072
    %v1157 = vunpack.c.h.b16 %v1072
    %v1158 = vunpack.c.l.b16 %v1073
    %v1159 = vunpack.c.h.b16 %v1073
    %v1160 = vunpack.c.l.b16 %v1074
    %v1161 = vunpack.c.h.b16 %v1074
    %v1162 = vunpack.c.l.b16 %v1075
    %v1163 = vunpack.c.h.b16 %v1075
    %v1164 = vunpack.c.l.b16 %v1076
    %v1165 = vunpack.c.h.b16 %v1076
    %v1166 = vunpack.c.l.b16 %v1077
    %v1167 = vunpack.c.h.b16 %v1077
    %v1168 = vunpack.c.l.b16 %v1078
    %v1169 = vunpack.c.h.b16 %v1078
    %v1170 = vunpack.c.l.b16 %v1079
    %v1171 = vunpack.c.h.b16 %v1079
    %v1172 = vunpack.c.l.b16 %v1080
    %v1173 = vunpack.c.h.b16 %v1080
    %v1174 = vunpack.c.l.b16 %v1081
    %v1175 = vunpack.c.h.b16 %v1081
    %v1176 = vunpack.c.l.b16 %v1082
    %v1177 = vunpack.c.h.b16 %v1082
    %v1178 = vunpack.c.l.b16 %v1083
    %v1179 = vunpack.c.h.b16 %v1083
    %v1180 = vunpack.c.l.b16 %v1084
    %v1181 = vunpack.c.h.b16 %v1084
    %v1182 = vunpack.c.l.b16 %v1085
    %v1183 = vunpack.c.h.b16 %v1085
    %v1184 = vunpack.c.l.b16 %v1086
    %v1185 = vunpack.c.h.b16 %v1086
    %v1186 = vunpack.c.l.b16 %v1087
    %v1187 = vunpack.c.h.b16 %v1087
    %v1188 = vunpack.c.l.b16 %v1088
    %v1189 = vunpack.c.h.b16 %v1088
    %v1190 = vunpack.c.l.b16 %v1089
    %v1191 = vunpack.c.h.b16 %v1089
    %v1192 = vunpack.c.l.b16 %v1090
    %v1193 = vunpack.c.h.b16 %v1090
    %v1194 = vunpack.c.l.b16 %v1091
    %v1195 = vunpack.c.h.b16 %v1091
    %v1196 = vunpack.c.l.b16 %v1092
    %v1197 = vunpack.c.h.b16 %v1092
    %v1198 = vunpack.c.l.b16 %v1093
    %v1199 = vunpack.c.h.b16 %v1093
    %v1200 = vunpack.c.l.b16 %v1094
    %v1201 = vunpack.c.h.b16 %v1094
    %v1202 = vunpack.c.l.b16 %v1095
    %v1203 = vunpack.c.h.b16 %v1095
    %v1204 = vunpack.c.l.b16 %v1096
    %v1205 = vunpack.c.h.b16 %v1096
    %v1206 = vpack.c.b16 %v1144, %v1142
    %v1207 = vpack.c.b16 %v1145, %v1143
    %v1208 = vpack.c.b16 %v1148, %v1146
    %v1209 = vpack.c.b16 %v1149, %v1147
    %v1210 = vpack.c.b16 %v1152, %v1150
    %v1211 = vpack.c.b16 %v1153, %v1151
    %v1212 = vpack.c.b16 %v1156, %v1154
    %v1213 = vpack.c.b16 %v1157, %v1155
    %v1214 = vpack.c.b16 %v1160, %v1158
    %v1215 = vpack.c.b16 %v1161, %v1159
    %v1216 = vpack.c.b16 %v1164, %v1162
    %v1217 = vpack.c.b16 %v1165, %v1163
    %v1218 = vpack.c.b16 %v1168, %v1166
    %v1219 = vpack.c.b16 %v1169, %v1167
    %v1220 = vpack.c.b16 %v1172, %v1170
    %v1221 = vpack.c.b16 %v1173, %v1171
    %v1222 = vpack.c.b16 %v1176, %v1174
    %v1223 = vpack.c.b16 %v1177, %v1175
    %v1224 = vpack.c.b16 %v1180, %v1178
    %v1225 = vpack.c.b16 %v1181, %v1179
    %v1226 = vpack.c.b16 %v1184, %v1182
    %v1227 = vpack.c.b16 %v1185, %v1183
    %v1228 = vpack.c.b16 %v1188, %v1186
    %v1229 = vpack.c.b16 %v1189, %v1187
    %v1230 = vpack.c.b16 %v1192, %v1190
    %v1231 = vpack.c.b16 %v1193, %v1191
    %v1232 = vpack.c.b16 %v1196, %v1194
    %v1233 = vpack.c.b16 %v1197, %v1195
    %v1234 = vpack.c.b16 %v1200, %v1198
    %v1235 = vpack.c.b16 %v1201, %v1199
    %v1236 = vpack.c.b16 %v1204, %v1202
    %v1237 = vpack.c.b16 %v1205, %v1203
    %1270 = vmatprep.subr.bf16.mxu0 %v1221
    %1271 = vmatpush1.bf16.msra.mxu0 %v1220
    %1272 = vmatprep.subr.bf16.mxu0 %v1219
    %1273 = vmatpush1.bf16.msra.mxu0 %v1218
    %1274 = vmatprep.subr.bf16.mxu0 %v1217
    %1275 = vmatpush1.bf16.msra.mxu0 %v1216
    %1276 = vmatprep.subr.bf16.mxu0 %v1215
    %1277 = vmatpush1.bf16.msra.mxu0 %v1214
    %1278 = vmatprep.subr.bf16.mxu0 %v1213
    %1279 = vmatpush1.bf16.msra.mxu0 %v1212
    %1280 = vmatprep.subr.bf16.mxu0 %v1211
    %1281 = vmatpush1.bf16.msra.mxu0 %v1210
    %1282 = vmatprep.subr.bf16.mxu0 %v1209
    %1283 = vmatpush1.bf16.msra.mxu0 %v1208
    %1284 = vmatprep.subr.bf16.mxu0 %v1207
    %1285 = vmatpush1.bf16.msra.mxu0 %v1206
    %1286 = vmatprep.subr.bf16.mxu0 %v1237
    %1287 = vmatpush2.bf16.msra.mxu0 %v1236
    %1288 = vmatprep.subr.bf16.mxu0 %v1235
    %1289 = vmatpush2.bf16.msra.mxu0 %v1234
    %1290 = vmatprep.subr.bf16.mxu0 %v1233
    %1291 = vmatpush2.bf16.msra.mxu0 %v1232
    %1292 = vmatprep.subr.bf16.mxu0 %v1231
    %1293 = vmatpush2.bf16.msra.mxu0 %v1230
    %1294 = vmatprep.subr.bf16.mxu0 %v1229
    %1295 = vmatpush2.bf16.msra.mxu0 %v1228
    %1296 = vmatprep.subr.bf16.mxu0 %v1227
    %1297 = vmatpush2.bf16.msra.mxu0 %v1226
    %1298 = vmatprep.subr.bf16.mxu0 %v1225
    %1299 = vmatpush2.bf16.msra.mxu0 %v1224
    %1300 = vmatprep.subr.bf16.mxu0 %v1223
    %1301 = vmatpush2.bf16.msra.mxu0 %v1222
    %1302 = vmatprep.mubr.bf16.mxu0 %v1098
    %1303 = vmatmul.mubr.bf16.gmra.mxu0 %v1097
    %v1304 = vpop.f32.mrf.mxu0
    %v1305 = vadd.f32 %v1105, %v1304
    %v1306 = vpop.f32.mrf.mxu0
    %v1307 = vadd.f32 %v1109, %v1306
    %v1308 = vpop.f32.mrf.mxu0
    %v1309 = vpop.f32.mrf.mxu0
    %1310 = vdwg.mxu0
    %v1311 = vtanh.pop %v1305
    %v1312 = vtanh.pop %v1307
    %1313 = vst [vmem:[%s2] sm:$0xff] %v1311
    %1314 = vst [vmem:[%s2 + $0x8] sm:$0xff] %v1312
    // Predicated region
    $region14: #{softsign_actor.1} parent=1 // pred_check
      _
    $region15: #{softsign_actor.1} parent=1 // pred_check_branch
      %1316 = sbr.rel (0) target = $region17
    $region16: #{softsign_actor.1} parent=1 // pred_region
      _
    $region17: #{softsign_actor.1} parent=1 // pred_fallthru
      _
    // Predicated region
    $region18: #{softsign_actor.1} parent=1 // pred_check
      _
    $region19: #{softsign_actor.1} parent=1 // pred_check_branch
      %1318 = sbr.rel (0) target = $region21
    $region20: #{softsign_actor.1} parent=1 // pred_region
      _
    $region21: #{softsign_actor.1} parent=1 // pred_fallthru
      _
    %1319 = vsyncpa [#allocation3], 1

</llo_original>
